<compile_context>
chip_gen: v7x
topology: tpu7x:2x2x1
jax: 0.10.0
libtpu: 0.0.40
codegen_flags: <defaults>
</compile_context>

<pallas_src>
import functools

import jax
import jax.numpy as jnp
from jax.experimental import pallas as pl
from jax.experimental.pallas import tpu as pltpu


# ----------------------------- kernel ---------------------------------------


def spin_loss_kernel(seqs_ref, plen_ref, pe_ref, pw_ref, re_ref, rw_ref,
                     out_ref, *, pad_id, lam, vocab):
    seqs = seqs_ref[...]                # (2, B, N) int32; [0]=generated, [1]=real
    plen = plen_ref[...]                # (B, 1) int32
    two, b, n = seqs.shape

    # ---- shared encode / mask work (hoisted: computed once, reused by both
    # ---- the policy and the reference pass) --------------------------------
    seq_mask = seqs != pad_id                                   # (2, B, N)
    seq0 = jnp.where(seq_mask, seqs, 0)                         # masked_fill_(~m, 0)

    pos = jax.lax.broadcasted_iota(jnp.int32, (b, n), 1)        # (B, N)
    prompt_mask = pos < plen                                    # (B, N)
    final_mask = jnp.logical_and(seq_mask,
                                 jnp.logical_not(prompt_mask)[None])
    maskf = final_mask.astype(jnp.float32)                      # (2, B, N)
    total = jnp.sum(maskf, axis=-1, keepdims=True)              # (2, B, 1)

    # one-hot of the observed tokens over the vocab (lane) axis, built once.
    vocab_iota = jax.lax.broadcasted_iota(jnp.int32, (two, b, n, vocab), 3)
    onehot = (seq0[..., None] == vocab_iota).astype(jnp.float32)  # (2,B,N,V)

    # identity mask used to pull diag(log_softmax(M)) out as a lane-row.
    eye = (jax.lax.broadcasted_iota(jnp.int32, (vocab, vocab), 0) ==
           jax.lax.broadcasted_iota(jnp.int32, (vocab, vocab), 1)
           ).astype(jnp.float32)                                # (V, V)

    log_eps = jnp.log(jnp.float32(1e-20))

    def masked_mean_logprob(emb, w):
        # tiny-LM logits for every possible input token: M[v] = E[v] @ W.
        m_tab = jnp.dot(emb, w, preferred_element_type=jnp.float32)   # (V, V)
        # fused log-softmax over the vocab (lane) axis.
        row_max = jnp.max(m_tab, axis=-1, keepdims=True)              # (V, 1)
        lse = row_max + jnp.log(
            jnp.sum(jnp.exp(m_tab - row_max), axis=-1, keepdims=True))
        logp_tab = m_tab - lse                                        # (V, V)
        # log P(token v | input v) laid out along lanes (sublane reduce w/ eye).
        tab_row = jnp.sum(logp_tab * eye, axis=0, keepdims=True)      # (1, V)
        tab_row = jnp.maximum(tab_row, log_eps)   # == probs.clamp(1e-20).log()
        # gather per-position log-prob with the shared one-hot.
        logp = jnp.sum(onehot * tab_row[None, None], axis=-1)         # (2,B,N)
        # masked mean over non-pad, non-prompt tokens.
        mean = jnp.sum(logp * maskf, axis=-1, keepdims=True) / jnp.maximum(
            total, 1e-5)
        return jnp.where(total == 0.0, 0.0, mean)                     # (2,B,1)

    pol = masked_mean_logprob(pe_ref[...], pw_ref[...])
    ref = masked_mean_logprob(re_ref[...], rw_ref[...])

    pol_gen, pol_real = pol[0], pol[1]                                # (B, 1)
    ref_gen, ref_real = ref[0], ref[1]

    # Equation 4.7: -logsigmoid(lambda * ((pr - rr) - (pg - rg)))
    x = lam * (pol_real - ref_real - (pol_gen - ref_gen))             # (B, 1)
    log_sig = jnp.minimum(x, 0.0) - jnp.log(1.0 + jnp.exp(-jnp.abs(x)))
    out_ref[...] = jnp.mean(-log_sig, keepdims=True)                  # (1, 1)


# ----------------------------- wrapper ---------------------------------------


def spin_loss(gen_seq, real_seq, prompt_len, policy_emb, policy_w, ref_emb,
              ref_w, *, pad_id, lam):
    b, _ = gen_seq.shape
    vocab = policy_emb.shape[0]

    # stack generated + real so masks / one-hot are built once in-kernel.
    seqs = jnp.stack(
        [gen_seq.astype(jnp.int32), real_seq.astype(jnp.int32)], axis=0)
    plen = prompt_len.reshape(b, 1).astype(jnp.int32)

    kernel = functools.partial(spin_loss_kernel, pad_id=pad_id, lam=lam,
                               vocab=vocab)
    vmem = pltpu.MemorySpace.VMEM
    out = pl.pallas_call(
        kernel,
        out_shape=jax.ShapeDtypeStruct((1, 1), jnp.float32),
        in_specs=[pl.BlockSpec(memory_space=vmem)] * 6,
        out_specs=pl.BlockSpec(memory_space=vmem),
    )(seqs, plen, policy_emb, policy_w, ref_emb, ref_w)
    return out[0, 0]


# ----------------------------- pure-JAX reference -----------------------------


def spin_loss_ref(gen_seq, real_seq, prompt_len, pe, pw, re, rw, *, pad_id,
                  lam):
    def lp_mean(seq, emb, w):
        seq_mask = seq != pad_id
        seq0 = jnp.where(seq_mask, seq, 0)
        logits = jnp.dot(emb[seq0], w, precision=jax.lax.Precision.HIGHEST)
        logp_all = jax.nn.log_softmax(logits, axis=-1)
        lp_tok = jnp.take_along_axis(logp_all, seq0[..., None], axis=-1)[..., 0]
        logprob = jnp.maximum(lp_tok, jnp.log(1e-20))  # clamp(p,1e-20).log()
        prompt_mask = jnp.arange(seq.shape[-1])[None, :] < prompt_len[:, None]
        mask = seq_mask & ~prompt_mask
        total = mask.sum(-1).astype(jnp.float32)
        mean = (logprob * mask).sum(-1) / jnp.maximum(total, 1e-5)
        return jnp.where(total == 0, 0.0, mean)

    pg = lp_mean(gen_seq, pe, pw)
    pr = lp_mean(real_seq, pe, pw)
    rg = lp_mean(gen_seq, re, rw)
    rr = lp_mean(real_seq, re, rw)
    x = lam * (pr - rr - (pg - rg))
    return jnp.mean(-jax.nn.log_sigmoid(x))


# ----------------------------- main -------------------------------------------


if __name__ == "__main__":
    B, N, V, H = 2, 8, 32, 32
    PAD_ID = -1          # SPINTrainer default pad_id
    LAM = 0.1            # spin_lambda default

    key = jax.random.PRNGKey(0)
    k0, k1, k2, k3, k4 = jax.random.split(key, 5)

    # "real" sequences from the SFT dataset and "generated" (prompt + sampled)
    real_seq = jax.random.randint(k0, (B, N), 0, V, dtype=jnp.int32)
    gen_seq = jax.random.randint(k1, (B, N), 0, V, dtype=jnp.int32)
    prompt_len = jnp.array([3, 2], dtype=jnp.int32)

    # pad_sequence padding on the generated batch (and one pad in real)
    gen_seq = gen_seq.at[0, 6:].set(PAD_ID)
    gen_seq = gen_seq.at[1, 5:].set(PAD_ID)
    real_seq = real_seq.at[1, 7].set(PAD_ID)

    # Deterministic tiny-LM parameters. SPIN.__init__ deep-copies the policy
    # into a frozen ref model; the policy is perturbed to emulate the state
    # after optimizer steps so the loss is non-trivial.
    ref_emb = jax.random.normal(k2, (V, H), dtype=jnp.float32) * 0.1
    ref_w = jax.random.normal(k3, (H, V), dtype=jnp.float32) * 0.1
    delta = jax.random.normal(k4, (V, H), dtype=jnp.float32) * 0.05
    policy_emb = ref_emb + delta
    policy_w = ref_w + 0.05

    loss = spin_loss(gen_seq, real_seq, prompt_len, policy_emb, policy_w,
                     ref_emb, ref_w, pad_id=PAD_ID, lam=LAM)
    loss = jax.block_until_ready(loss)

    expected = spin_loss_ref(gen_seq, real_seq, prompt_len, policy_emb,
                             policy_w, ref_emb, ref_w, pad_id=PAD_ID, lam=LAM)
    assert jnp.allclose(loss, expected, atol=1e-4, rtol=1e-4), (loss, expected)

    # TODO(synk): the outer SPINTrainer loop (DataLoader, Accelerator, AdamW,
    # autoregressive top-p sampling) is host orchestration with no Pallas
    # equivalent and is not reproduced here.
    print("KERNEL_OK")
</pallas_src>

<mosaic_0001>
module attributes {stable_mosaic.version = 11 : i64} {
  func.func @spin_loss_kernel(%arg0: memref<2x2x8xi32, #tpu.memory_space<vmem>>, %arg1: memref<2x1xi32, #tpu.memory_space<vmem>>, %arg2: memref<32x32xf32, #tpu.memory_space<vmem>>, %arg3: memref<32x32xf32, #tpu.memory_space<vmem>>, %arg4: memref<32x32xf32, #tpu.memory_space<vmem>>, %arg5: memref<32x32xf32, #tpu.memory_space<vmem>>, %arg6: memref<1x1xf32, #tpu.memory_space<vmem>>) attributes {dimension_semantics = [], scalar_prefetch = 0 : i64, scratch_operands = 0 : i64, tpu.core_type = #tpu.core_type<tc>} {
    %c0 = arith.constant 0 : index
    %c0_0 = arith.constant 0 : index
    %c0_1 = arith.constant 0 : index
    %0 = vector.load %arg0[%c0, %c0_0, %c0_1] : memref<2x2x8xi32, #tpu.memory_space<vmem>>, vector<2x2x8xi32>
    %c0_2 = arith.constant 0 : index
    %c0_3 = arith.constant 0 : index
    %1 = vector.load %arg1[%c0_2, %c0_3] : memref<2x1xi32, #tpu.memory_space<vmem>>, vector<2x1xi32>
    %c-1_i32 = arith.constant -1 : i32
    %2 = vector.broadcast %c-1_i32 : i32 to vector<2x2x8xi32>
    %3 = arith.cmpi ne, %0, %2 : vector<2x2x8xi32>
    %c0_i32 = arith.constant 0 : i32
    %4 = vector.broadcast %c0_i32 : i32 to vector<2x2x8xi32>
    %5 = arith.select %3, %0, %4 : vector<2x2x8xi1>, vector<2x2x8xi32>
    %6 = tpu.iota {dimensions = array<i32: 1>} : vector<2x8xi32>
    %7 = vector.broadcast %1 : vector<2x1xi32> to vector<2x8xi32>
    %8 = arith.cmpi slt, %6, %7 : vector<2x8xi32>
    %cst = arith.constant dense<true> : vector<2x8xi1>
    %9 = arith.xori %8, %cst : vector<2x8xi1>
    %10 = vector.shape_cast %9 : vector<2x8xi1> to vector<1x2x8xi1>
    %11 = vector.broadcast %10 : vector<1x2x8xi1> to vector<2x2x8xi1>
    %12 = arith.andi %3, %11 : vector<2x2x8xi1>
    %13 = arith.extui %12 : vector<2x2x8xi1> to vector<2x2x8xi32>
    %14 = arith.sitofp %13 : vector<2x2x8xi32> to vector<2x2x8xf32>
    %cst_4 = arith.constant dense<0.000000e+00> : vector<2x2xf32>
    %15 = vector.multi_reduction <add>, %14, %cst_4 [2] : vector<2x2x8xf32> to vector<2x2xf32>
    %16 = vector.shape_cast %15 : vector<2x2xf32> to vector<2x2x1xf32>
    %17 = tpu.iota {dimensions = array<i32: 3>} : vector<2x2x8x32xi32>
    %18 = vector.shape_cast %5 : vector<2x2x8xi32> to vector<2x2x8x1xi32>
    %19 = vector.broadcast %18 : vector<2x2x8x1xi32> to vector<2x2x8x32xi32>
    %20 = arith.cmpi eq, %19, %17 : vector<2x2x8x32xi32>
    %21 = arith.extui %20 : vector<2x2x8x32xi1> to vector<2x2x8x32xi32>
    %22 = arith.sitofp %21 : vector<2x2x8x32xi32> to vector<2x2x8x32xf32>
    %23 = tpu.iota {dimensions = array<i32: 0>} : vector<32x32xi32>
    %24 = tpu.iota {dimensions = array<i32: 1>} : vector<32x32xi32>
    %25 = arith.cmpi eq, %23, %24 : vector<32x32xi32>
    %26 = arith.extui %25 : vector<32x32xi1> to vector<32x32xi32>
    %27 = arith.sitofp %26 : vector<32x32xi32> to vector<32x32xf32>
    %cst_5 = arith.constant 9.99999968E-21 : f32
    %28 = math.log %cst_5 : f32
    %c0_6 = arith.constant 0 : index
    %c0_7 = arith.constant 0 : index
    %29 = vector.load %arg2[%c0_6, %c0_7] : memref<32x32xf32, #tpu.memory_space<vmem>>, vector<32x32xf32>
    %c0_8 = arith.constant 0 : index
    %c0_9 = arith.constant 0 : index
    %30 = vector.load %arg3[%c0_8, %c0_9] : memref<32x32xf32, #tpu.memory_space<vmem>>, vector<32x32xf32>
    %cst_10 = arith.constant dense<0.000000e+00> : vector<32x32xf32>
    %31 = tpu.matmul %29, %30, %cst_10 {dimension_numbers = #tpu.dot_dimension_numbers<[1], [0], [0], [1], [0, 0, 1, 1], [], []>} : vector<32x32xf32>, vector<32x32xf32>, vector<32x32xf32> -> vector<32x32xf32>
    %cst_11 = arith.constant dense<0xFF800000> : vector<32xf32>
    %32 = vector.multi_reduction <maximumf>, %31, %cst_11 [1] : vector<32x32xf32> to vector<32xf32>
    %33 = vector.shape_cast %32 : vector<32xf32> to vector<32x1xf32>
    %34 = vector.broadcast %33 : vector<32x1xf32> to vector<32x32xf32>
    %35 = arith.subf %31, %34 : vector<32x32xf32>
    %36 = math.exp %35 : vector<32x32xf32>
    %cst_12 = arith.constant dense<0.000000e+00> : vector<32xf32>
    %37 = vector.multi_reduction <add>, %36, %cst_12 [1] : vector<32x32xf32> to vector<32xf32>
    %38 = vector.shape_cast %37 : vector<32xf32> to vector<32x1xf32>
    %39 = math.log %38 : vector<32x1xf32>
    %40 = arith.addf %33, %39 : vector<32x1xf32>
    %41 = vector.broadcast %40 : vector<32x1xf32> to vector<32x32xf32>
    %42 = arith.subf %31, %41 : vector<32x32xf32>
    %43 = arith.mulf %42, %27 : vector<32x32xf32>
    %cst_13 = arith.constant dense<0.000000e+00> : vector<32xf32>
    %44 = vector.multi_reduction <add>, %43, %cst_13 [0] : vector<32x32xf32> to vector<32xf32>
    %45 = vector.shape_cast %44 : vector<32xf32> to vector<1x32xf32>
    %46 = vector.broadcast %28 : f32 to vector<1x32xf32>
    %47 = arith.maximumf %45, %46 : vector<1x32xf32>
    %48 = vector.shape_cast %47 : vector<1x32xf32> to vector<1x1x1x32xf32>
    %49 = vector.broadcast %48 : vector<1x1x1x32xf32> to vector<2x2x8x32xf32>
    %50 = arith.mulf %22, %49 : vector<2x2x8x32xf32>
    %cst_14 = arith.constant dense<0.000000e+00> : vector<2x2x8xf32>
    %51 = vector.multi_reduction <add>, %50, %cst_14 [3] : vector<2x2x8x32xf32> to vector<2x2x8xf32>
    %52 = arith.mulf %51, %14 : vector<2x2x8xf32>
    %cst_15 = arith.constant dense<0.000000e+00> : vector<2x2xf32>
    %53 = vector.multi_reduction <add>, %52, %cst_15 [2] : vector<2x2x8xf32> to vector<2x2xf32>
    %54 = vector.shape_cast %53 : vector<2x2xf32> to vector<2x2x1xf32>
    %cst_16 = arith.constant 9.99999974E-6 : f32
    %55 = vector.broadcast %cst_16 : f32 to vector<2x2x1xf32>
    %56 = arith.maximumf %16, %55 : vector<2x2x1xf32>
    %57 = arith.divf %54, %56 : vector<2x2x1xf32>
    %cst_17 = arith.constant 0.000000e+00 : f32
    %58 = vector.broadcast %cst_17 : f32 to vector<2x2x1xf32>
    %59 = arith.cmpf oeq, %16, %58 : vector<2x2x1xf32>
    %cst_18 = arith.constant 0.000000e+00 : f32
    %60 = vector.broadcast %cst_18 : f32 to vector<2x2x1xf32>
    %61 = arith.select %59, %60, %57 : vector<2x2x1xi1>, vector<2x2x1xf32>
    %c0_19 = arith.constant 0 : index
    %c0_20 = arith.constant 0 : index
    %62 = vector.load %arg4[%c0_19, %c0_20] : memref<32x32xf32, #tpu.memory_space<vmem>>, vector<32x32xf32>
    %c0_21 = arith.constant 0 : index
    %c0_22 = arith.constant 0 : index
    %63 = vector.load %arg5[%c0_21, %c0_22] : memref<32x32xf32, #tpu.memory_space<vmem>>, vector<32x32xf32>
    %cst_23 = arith.constant dense<0.000000e+00> : vector<32x32xf32>
    %64 = tpu.matmul %62, %63, %cst_23 {dimension_numbers = #tpu.dot_dimension_numbers<[1], [0], [0], [1], [0, 0, 1, 1], [], []>} : vector<32x32xf32>, vector<32x32xf32>, vector<32x32xf32> -> vector<32x32xf32>
    %cst_24 = arith.constant dense<0xFF800000> : vector<32xf32>
    %65 = vector.multi_reduction <maximumf>, %64, %cst_24 [1] : vector<32x32xf32> to vector<32xf32>
    %66 = vector.shape_cast %65 : vector<32xf32> to vector<32x1xf32>
    %67 = vector.broadcast %66 : vector<32x1xf32> to vector<32x32xf32>
    %68 = arith.subf %64, %67 : vector<32x32xf32>
    %69 = math.exp %68 : vector<32x32xf32>
    %cst_25 = arith.constant dense<0.000000e+00> : vector<32xf32>
    %70 = vector.multi_reduction <add>, %69, %cst_25 [1] : vector<32x32xf32> to vector<32xf32>
    %71 = vector.shape_cast %70 : vector<32xf32> to vector<32x1xf32>
    %72 = math.log %71 : vector<32x1xf32>
    %73 = arith.addf %66, %72 : vector<32x1xf32>
    %74 = vector.broadcast %73 : vector<32x1xf32> to vector<32x32xf32>
    %75 = arith.subf %64, %74 : vector<32x32xf32>
    %76 = arith.mulf %75, %27 : vector<32x32xf32>
    %cst_26 = arith.constant dense<0.000000e+00> : vector<32xf32>
    %77 = vector.multi_reduction <add>, %76, %cst_26 [0] : vector<32x32xf32> to vector<32xf32>
    %78 = vector.shape_cast %77 : vector<32xf32> to vector<1x32xf32>
    %79 = vector.broadcast %28 : f32 to vector<1x32xf32>
    %80 = arith.maximumf %78, %79 : vector<1x32xf32>
    %81 = vector.shape_cast %80 : vector<1x32xf32> to vector<1x1x1x32xf32>
    %82 = vector.broadcast %81 : vector<1x1x1x32xf32> to vector<2x2x8x32xf32>
    %83 = arith.mulf %22, %82 : vector<2x2x8x32xf32>
    %cst_27 = arith.constant dense<0.000000e+00> : vector<2x2x8xf32>
    %84 = vector.multi_reduction <add>, %83, %cst_27 [3] : vector<2x2x8x32xf32> to vector<2x2x8xf32>
    %85 = arith.mulf %84, %14 : vector<2x2x8xf32>
    %cst_28 = arith.constant dense<0.000000e+00> : vector<2x2xf32>
    %86 = vector.multi_reduction <add>, %85, %cst_28 [2] : vector<2x2x8xf32> to vector<2x2xf32>
    %87 = vector.shape_cast %86 : vector<2x2xf32> to vector<2x2x1xf32>
    %cst_29 = arith.constant 9.99999974E-6 : f32
    %88 = vector.broadcast %cst_29 : f32 to vector<2x2x1xf32>
    %89 = arith.maximumf %16, %88 : vector<2x2x1xf32>
    %90 = arith.divf %87, %89 : vector<2x2x1xf32>
    %cst_30 = arith.constant 0.000000e+00 : f32
    %91 = vector.broadcast %cst_30 : f32 to vector<2x2x1xf32>
    %92 = arith.cmpf oeq, %16, %91 : vector<2x2x1xf32>
    %cst_31 = arith.constant 0.000000e+00 : f32
    %93 = vector.broadcast %cst_31 : f32 to vector<2x2x1xf32>
    %94 = arith.select %92, %93, %90 : vector<2x2x1xi1>, vector<2x2x1xf32>
    %95 = vector.extract_strided_slice %61 {offsets = [0, 0, 0], sizes = [1, 2, 1], strides = [1, 1, 1]} : vector<2x2x1xf32> to vector<1x2x1xf32>
    %96 = vector.shape_cast %95 : vector<1x2x1xf32> to vector<2x1xf32>
    %97 = vector.extract_strided_slice %61 {offsets = [1, 0, 0], sizes = [1, 2, 1], strides = [1, 1, 1]} : vector<2x2x1xf32> to vector<1x2x1xf32>
    %98 = vector.shape_cast %97 : vector<1x2x1xf32> to vector<2x1xf32>
    %99 = vector.extract_strided_slice %94 {offsets = [0, 0, 0], sizes = [1, 2, 1], strides = [1, 1, 1]} : vector<2x2x1xf32> to vector<1x2x1xf32>
    %100 = vector.shape_cast %99 : vector<1x2x1xf32> to vector<2x1xf32>
    %101 = vector.extract_strided_slice %94 {offsets = [1, 0, 0], sizes = [1, 2, 1], strides = [1, 1, 1]} : vector<2x2x1xf32> to vector<1x2x1xf32>
    %102 = vector.shape_cast %101 : vector<1x2x1xf32> to vector<2x1xf32>
    %103 = arith.subf %98, %102 : vector<2x1xf32>
    %104 = arith.subf %96, %100 : vector<2x1xf32>
    %105 = arith.subf %103, %104 : vector<2x1xf32>
    %cst_32 = arith.constant 1.000000e-01 : f32
    %106 = vector.broadcast %cst_32 : f32 to vector<2x1xf32>
    %107 = arith.mulf %106, %105 : vector<2x1xf32>
    %cst_33 = arith.constant 0.000000e+00 : f32
    %108 = vector.broadcast %cst_33 : f32 to vector<2x1xf32>
    %109 = arith.minimumf %107, %108 : vector<2x1xf32>
    %110 = math.absf %107 : vector<2x1xf32>
    %cst_34 = arith.constant 0.000000e+00 : f32
    %111 = vector.broadcast %cst_34 : f32 to vector<2x1xf32>
    %112 = arith.subf %111, %110 : vector<2x1xf32>
    %113 = math.exp %112 : vector<2x1xf32>
    %cst_35 = arith.constant 1.000000e+00 : f32
    %114 = vector.broadcast %cst_35 : f32 to vector<2x1xf32>
    %115 = arith.addf %114, %113 : vector<2x1xf32>
    %116 = math.log %115 : vector<2x1xf32>
    %117 = arith.subf %109, %116 : vector<2x1xf32>
    %cst_36 = arith.constant 0.000000e+00 : f32
    %118 = vector.broadcast %cst_36 : f32 to vector<2x1xf32>
    %119 = arith.subf %118, %117 : vector<2x1xf32>
    %120 = vector.shape_cast %119 : vector<2x1xf32> to vector<1x2x1xf32>
    %cst_37 = arith.constant dense<0.000000e+00> : vector<1xf32>
    %121 = vector.multi_reduction <add>, %120, %cst_37 [1, 2] : vector<1x2x1xf32> to vector<1xf32>
    %122 = vector.shape_cast %121 : vector<1xf32> to vector<1x1x1xf32>
    %123 = vector.extract %122[0, 0, 0] : f32 from vector<1x1x1xf32>
    %124 = vector.broadcast %123 : f32 to vector<1x1xf32>
    %cst_38 = arith.constant 2.000000e+00 : f32
    %125 = vector.broadcast %cst_38 : f32 to vector<1x1xf32>
    %126 = arith.divf %124, %125 : vector<1x1xf32>
    %c0_39 = arith.constant 0 : index
    %c0_40 = arith.constant 0 : index
    %127 = vector.load %arg6[%c0_39, %c0_40] : memref<1x1xf32, #tpu.memory_space<vmem>>, vector<1x1xf32>
    tpu.vector_store %arg6[%c0_39, %c0_40], %126 {strides = array<i32>} : memref<1x1xf32, #tpu.memory_space<vmem>>, vector<1x1xf32>,
    return
  }
}

</mosaic_0001>

<llo_original>
// kernel: tpu_custom_call.1
$region0: #{tpu_custom_call.1}
  #allocation0 [shape = 'u32[]', space=smem, size = 0x4, offset = 0x4, fixed_abs, tag = 'smem constant byte address 0x4 - core index']
  #allocation1 [shape = 'u32[144,128]{1,0:T(1,128)}', space=vmem, size = 0x12000, scoped, tag = 'internal scratch']
  %s0 = inlined_call_operand.hbm [shape: s32[2,2,8], index: 0, kind: input, shape index: {}]
  %s1 = inlined_call_operand.vmem [shape: s32[2,1], index: 1, kind: input, shape index: {}]
  %s2 = inlined_call_operand.hbm [shape: f32[32,32], index: 2, kind: input, shape index: {}]
  %s3 = inlined_call_operand.hbm [shape: f32[32,32], index: 3, kind: input, shape index: {}]
  %s4 = inlined_call_operand.hbm [shape: f32[32,32], index: 4, kind: input, shape index: {}]
  %s5 = inlined_call_operand.hbm [shape: f32[32,32], index: 5, kind: input, shape index: {}]
  %s6 = inlined_call_operand.hbm [shape: f32[1,1], index: 6, kind: output, shape index: {}]
  %s7 = sld [smem:[#allocation0]]
  $region54: #{tpu_custom_call.1} parent=0
    _
  %s9 = ssub.s32 1, %s7
  %s10 = scalar_select 0, %s9, %s7
  $region1: #{tpu_custom_call.1} parent=0
    #allocation2 [shape = 'u8[2048]{0}', space=vmem, size = 0x800, scoped, tag = 'input window, operand 0, single buffered']
    #allocation3 [shape = 's32[1]{0}', space=sflag, size = 0x4, scoped, tag = 'scoped memory for tpu_custom_call.1']
    #allocation4 [shape = 's32[1]{0}', space=sflag, size = 0x4, scoped, tag = 'scoped memory for tpu_custom_call.1']
    #allocation5 [shape = 'u8[16384]{0}', space=vmem, size = 0x4000, scoped, tag = 'input window, operand 2, single buffered']
    #allocation6 [shape = 's32[1]{0}', space=sflag, size = 0x4, scoped, tag = 'scoped memory for tpu_custom_call.1']
    #allocation7 [shape = 'u8[16384]{0}', space=vmem, size = 0x4000, scoped, tag = 'input window, operand 3, single buffered']
    #allocation8 [shape = 'u8[16384]{0}', space=vmem, size = 0x4000, scoped, tag = 'input window, operand 4, single buffered']
    #allocation9 [shape = 's32[1]{0}', space=sflag, size = 0x4, scoped, tag = 'scoped memory for tpu_custom_call.1']
    #allocation10 [shape = 'u8[16384]{0}', space=vmem, size = 0x4000, scoped, tag = 'input window, operand 5, single buffered']
    #allocation11 [shape = 'u8[512]{0}', space=vmem, size = 0x400, scoped, tag = 'output window, operand 0, single buffered']
    %11 = vsyncpa [#allocation3], 0
    %12 = vsyncpa [#allocation6], 0
    %13 = vsyncpa [#allocation9], 0
    %14 = vsyncpa [#allocation4], 0
    // Predicated region
    $region2: #{tpu_custom_call.1} parent=1 // pred_check
      _
    $region3: #{tpu_custom_call.1} parent=1 // pred_check_branch
      %16 = sbr.rel (0) target = $region5
    $region4: #{tpu_custom_call.1} parent=1 // pred_region
      %s18 = ssub.s32 64, 64
      %19 = vsyncadd [#allocation3], %s18
      %s20 = sshll.u32 [#allocation2], 4
      %s21 = int_to_ptr.vmem [resolvable:$true] %s20
      %26 = dma.hbm_to_vmem [thread:$0]  %s0, 64, %s21, [#allocation3], 32, 32, 2
    $region5: #{tpu_custom_call.1} parent=1 // pred_fallthru
      _
    // Predicated region
    $region6: #{tpu_custom_call.1} parent=1 // pred_check
      _
    $region7: #{tpu_custom_call.1} parent=1 // pred_check_branch
      %28 = sbr.rel (0) target = $region9
    $region8: #{tpu_custom_call.1} parent=1 // pred_region
      _
    $region9: #{tpu_custom_call.1} parent=1 // pred_fallthru
      _
    // Predicated region
    $region10: #{tpu_custom_call.1} parent=1 // pred_check
      _
    $region11: #{tpu_custom_call.1} parent=1 // pred_check_branch
      %30 = sbr.rel (0) target = $region13
    $region12: #{tpu_custom_call.1} parent=1 // pred_region
      %s32 = ssub.s32 512, 512
      %33 = vsyncadd [#allocation6], %s32
      %s34 = sshll.u32 [#allocation5], 4
      %s35 = int_to_ptr.vmem [resolvable:$true] %s34
      %40 = dma.hbm_to_vmem [thread:$0]  %s2, 512, %s35, [#allocation6], 128, 128, 8
    $region13: #{tpu_custom_call.1} parent=1 // pred_fallthru
      _
    // Predicated region
    $region14: #{tpu_custom_call.1} parent=1 // pred_check
      _
    $region15: #{tpu_custom_call.1} parent=1 // pred_check_branch
      %42 = sbr.rel (0) target = $region17
    $region16: #{tpu_custom_call.1} parent=1 // pred_region
      %s44 = ssub.s32 512, 512
      %45 = vsyncadd [#allocation6], %s44
      %s46 = sshll.u32 [#allocation7], 4
      %s47 = int_to_ptr.vmem [resolvable:$true] %s46
      %52 = dma.hbm_to_vmem [thread:$0]  %s3, 512, %s47, [#allocation6], 128, 128, 8
    $region17: #{tpu_custom_call.1} parent=1 // pred_fallthru
      _
    // Predicated region
    $region18: #{tpu_custom_call.1} parent=1 // pred_check
      _
    $region19: #{tpu_custom_call.1} parent=1 // pred_check_branch
      %54 = sbr.rel (0) target = $region21
    $region20: #{tpu_custom_call.1} parent=1 // pred_region
      %s56 = ssub.s32 512, 512
      %57 = vsyncadd [#allocation9], %s56
      %s58 = sshll.u32 [#allocation8], 4
      %s59 = int_to_ptr.vmem [resolvable:$true] %s58
      %64 = dma.hbm_to_vmem [thread:$0]  %s4, 512, %s59, [#allocation9], 128, 128, 8
    $region21: #{tpu_custom_call.1} parent=1 // pred_fallthru
      _
    // Predicated region
    $region22: #{tpu_custom_call.1} parent=1 // pred_check
      _
    $region23: #{tpu_custom_call.1} parent=1 // pred_check_branch
      %66 = sbr.rel (0) target = $region25
    $region24: #{tpu_custom_call.1} parent=1 // pred_region
      %s68 = ssub.s32 512, 512
      %69 = vsyncadd [#allocation9], %s68
      %s70 = sshll.u32 [#allocation10], 4
      %s71 = int_to_ptr.vmem [resolvable:$true] %s70
      %76 = dma.hbm_to_vmem [thread:$0]  %s5, 512, %s71, [#allocation9], 128, 128, 8
    $region25: #{tpu_custom_call.1} parent=1 // pred_fallthru
      _
    // Predicated region
    $region26: #{tpu_custom_call.1} parent=1 // pred_check
      _
    $region27: #{tpu_custom_call.1} parent=1 // pred_check_branch
      %78 = sbr.rel (0) target = $region29
    $region28: #{tpu_custom_call.1} parent=1 // pred_region
      %79 = dma.done [#allocation3], 64
    $region29: #{tpu_custom_call.1} parent=1 // pred_fallthru
      _
    // Predicated region
    $region30: #{tpu_custom_call.1} parent=1 // pred_check
      _
    $region31: #{tpu_custom_call.1} parent=1 // pred_check_branch
      %81 = sbr.rel (0) target = $region33
    $region32: #{tpu_custom_call.1} parent=1 // pred_region
      %82 = dma.done [#allocation6], 512
    $region33: #{tpu_custom_call.1} parent=1 // pred_fallthru
      _
    // Predicated region
    $region34: #{tpu_custom_call.1} parent=1 // pred_check
      _
    $region35: #{tpu_custom_call.1} parent=1 // pred_check_branch
      %84 = sbr.rel (0) target = $region37
    $region36: #{tpu_custom_call.1} parent=1 // pred_region
      %85 = dma.done [#allocation6], 512
    $region37: #{tpu_custom_call.1} parent=1 // pred_fallthru
      _
    // Predicated region
    $region38: #{tpu_custom_call.1} parent=1 // pred_check
      _
    $region39: #{tpu_custom_call.1} parent=1 // pred_check_branch
      %87 = sbr.rel (0) target = $region41
    $region40: #{tpu_custom_call.1} parent=1 // pred_region
      %88 = dma.done [#allocation9], 512
    $region41: #{tpu_custom_call.1} parent=1 // pred_fallthru
      _
    // Predicated region
    $region42: #{tpu_custom_call.1} parent=1 // pred_check
      _
    $region43: #{tpu_custom_call.1} parent=1 // pred_check_branch
      %90 = sbr.rel (0) target = $region45
    $region44: #{tpu_custom_call.1} parent=1 // pred_region
      %91 = dma.done [#allocation9], 512
    $region45: #{tpu_custom_call.1} parent=1 // pred_fallthru
      _
    %v92 = vld [vmem:[#allocation2] sm:$0x3]
    %v93 = vld [vmem:[#allocation2 + $0x2] sm:$0x3]
    %v94 = vld [vmem:[%s1] sm:$0x3]
    %vm95 = vcmp.ne.s32.totalorder %v92, 4294967295
    %vm96 = vcmp.ne.s32.totalorder %v93, 4294967295
    %v97 = vsel %vm95, %v92, 0
    %v98 = vsel %vm96, %v93, 0
    %v99 = vlaneseq
    %v100 = vand.u32 %v99, 127
    %101 = vset.pattern.permute.xlu0 0
    %102 = vperm.xlu0 %101, %v94
    %v103 = vpop.permute.xlu0 %102
    %vm104 = vcmp.lt.s32.totalorder %v100, %v103
    %vm105 = vmxor %vm104, 1
    %v106 = vsel %vm105, 1, 0
    %vm107 = vcmp.eq.s32.totalorder %v106, 1
    %vm108 = vmand %vm95, %vm107
    %vm109 = vmand %vm96, %vm107
    %v110 = vsel %vm108, 1, 0
    %v111 = vsel %vm109, 1, 0
    %v112 = vcvt.s32.f32 %v110
    %v113 = vcvt.s32.f32 %v111
    %vm114 = vcmask 58368
    %v115 = vsel %vm114, %v112, 0.0
    %116 = vadd.xlane.f32.xlu0 %v115
    %v117 = vpop.xlane.xlu0 %116
    %v118 = vsel %vm114, %v113, 0.0
    %119 = vadd.xlane.f32.xlu0 %v118
    %v120 = vpop.xlane.xlu0 %119
    %v121 = vlaneseq
    %v122 = vshrl.u32 %v121, 7
    %v123 = vsub.s32 0, %v122
    %v124 = vrot.slane %v97, %v123
    %126 = vbcast.lane.b32.xlu0 %v124, 256
    %v127 = vpop.permute.xlu0 %126
    %v128 = vlaneseq
    %v129 = vshrl.u32 %v128, 7
    %v130 = vsub.s32 1, %v129
    %v131 = vrot.slane %v97, %v130
    %133 = vbcast.lane.b32.xlu0 %v131, 256
    %v134 = vpop.permute.xlu0 %133
    %v135 = vlaneseq
    %v136 = vshrl.u32 %v135, 7
    %v137 = vsub.s32 0, %v136
    %v138 = vrot.slane %v98, %v137
    %140 = vbcast.lane.b32.xlu0 %v138, 256
    %v141 = vpop.permute.xlu0 %140
    %v142 = vlaneseq
    %v143 = vshrl.u32 %v142, 7
    %v144 = vsub.s32 1, %v143
    %v145 = vrot.slane %v98, %v144
    %147 = vbcast.lane.b32.xlu0 %v145, 256
    %v148 = vpop.permute.xlu0 %147
    %vm149 = vcmp.eq.s32.totalorder %v127, %v100
    %vm150 = vcmp.eq.s32.totalorder %v134, %v100
    %vm151 = vcmp.eq.s32.totalorder %v141, %v100
    %vm152 = vcmp.eq.s32.totalorder %v148, %v100
    %v153 = vsel %vm149, 1, 0
    %v154 = vsel %vm150, 1, 0
    %v155 = vsel %vm151, 1, 0
    %v156 = vsel %vm152, 1, 0
    %v157 = vcvt.s32.f32 %v153
    %v158 = vcvt.s32.f32 %v154
    %v159 = vcvt.s32.f32 %v155
    %v160 = vcvt.s32.f32 %v156
    %v161 = vlaneseq
    %v162 = vshrl.u32 %v161, 7
    %v163 = vadd.s32 %v162, 8
    %v164 = vadd.s32 %v162, 16
    %v165 = vadd.s32 %v162, 24
    %vm166 = vcmp.eq.s32.totalorder %v162, %v100
    %vm167 = vcmp.eq.s32.totalorder %v163, %v100
    %vm168 = vcmp.eq.s32.totalorder %v164, %v100
    %vm169 = vcmp.eq.s32.totalorder %v165, %v100
    %v170 = vsel %vm166, 1, 0
    %v171 = vsel %vm167, 1, 0
    %v172 = vsel %vm168, 1, 0
    %v173 = vsel %vm169, 1, 0
    %v174 = vcvt.s32.f32 %v170
    %v175 = vcvt.s32.f32 %v171
    %v176 = vcvt.s32.f32 %v172
    %v177 = vcvt.s32.f32 %v173
    %v178 = vld [vmem:[#allocation5] sm:$0xff]
    %v179 = vld [vmem:[#allocation5 + $0x8] sm:$0xff]
    %v180 = vld [vmem:[#allocation5 + $0x10] sm:$0xff]
    %v181 = vld [vmem:[#allocation5 + $0x18] sm:$0xff]
    %v182 = vld [vmem:[#allocation7] sm:$0xff]
    %v183 = vld [vmem:[#allocation7 + $0x8] sm:$0xff]
    %v184 = vld [vmem:[#allocation7 + $0x10] sm:$0xff]
    %v185 = vld [vmem:[#allocation7 + $0x18] sm:$0xff]
    %vm186 = vcmask 261120
    %v188 = vsel %vm186, %v178, 0
    %v191 = vsel %vm186, %v179, 0
    %v194 = vsel %vm186, %v180, 0
    %v197 = vsel %vm186, %v181, 0
    %199 = vmatprep.subr.mxu0 0.0
    %200 = vmatpush1.msra.mxu0 %v182
    %201 = vmatprep.subr.mxu0 0.0
    %202 = vmatpush1.msra.mxu0 %v183
    %203 = vmatprep.subr.mxu0 0.0
    %204 = vmatpush1.msra.mxu0 %v184
    %205 = vmatprep.subr.mxu0 0.0
    %206 = vmatpush1.msra.mxu0 %v185
    %207 = vmatprep.subr.mxu0 0.0
    %208 = vmatpush1.msra.mxu0 0.0
    %209 = vmatprep.subr.mxu0 0.0
    %210 = vmatpush1.msra.mxu0 0.0
    %211 = vmatprep.subr.mxu0 0.0
    %212 = vmatpush1.msra.mxu0 0.0
    %213 = vmatprep.subr.mxu0 0.0
    %214 = vmatpush1.msra.mxu0 0.0
    %215 = vmatprep.subr.mxu0 0.0
    %216 = vmatpush1.msra.mxu0 0.0
    %217 = vmatprep.subr.mxu0 0.0
    %218 = vmatpush1.msra.mxu0 0.0
    %219 = vmatprep.subr.mxu0 0.0
    %220 = vmatpush1.msra.mxu0 0.0
    %221 = vmatprep.subr.mxu0 0.0
    %222 = vmatpush1.msra.mxu0 0.0
    %223 = vmatprep.subr.mxu0 0.0
    %224 = vmatpush1.msra.mxu0 0.0
    %225 = vmatprep.subr.mxu0 0.0
    %226 = vmatpush1.msra.mxu0 0.0
    %227 = vmatprep.subr.mxu0 0.0
    %228 = vmatpush1.msra.mxu0 0.0
    %229 = vmatprep.subr.mxu0 0.0
    %230 = vmatpush1.msra.mxu0 0.0
    %231 = vmatprep.subr.mxu0 0.0
    %232 = vmatpush1.msra.mxu0 0.0
    %233 = vmatprep.subr.mxu0 0.0
    %234 = vmatpush1.msra.mxu0 0.0
    %235 = vmatprep.subr.mxu0 0.0
    %236 = vmatpush1.msra.mxu0 0.0
    %237 = vmatprep.subr.mxu0 0.0
    %238 = vmatpush1.msra.mxu0 0.0
    %239 = vmatprep.subr.mxu0 0.0
    %240 = vmatpush1.msra.mxu0 0.0
    %241 = vmatprep.subr.mxu0 0.0
    %242 = vmatpush1.msra.mxu0 0.0
    %243 = vmatprep.subr.mxu0 0.0
    %244 = vmatpush1.msra.mxu0 0.0
    %245 = vmatprep.subr.mxu0 0.0
    %246 = vmatpush1.msra.mxu0 0.0
    %247 = vmatprep.subr.mxu0 0.0
    %248 = vmatpush1.msra.mxu0 0.0
    %249 = vmatprep.subr.mxu0 0.0
    %250 = vmatpush1.msra.mxu0 0.0
    %251 = vmatprep.subr.mxu0 0.0
    %252 = vmatpush1.msra.mxu0 0.0
    %253 = vmatprep.subr.mxu0 0.0
    %254 = vmatpush1.msra.mxu0 0.0
    %255 = vmatprep.subr.mxu0 0.0
    %256 = vmatpush1.msra.mxu0 0.0
    %257 = vmatprep.subr.mxu0 0.0
    %258 = vmatpush1.msra.mxu0 0.0
    %259 = vmatprep.subr.mxu0 0.0
    %260 = vmatpush1.msra.mxu0 0.0
    %261 = vmatprep.subr.mxu0 0.0
    %262 = vmatpush1.msra.mxu0 0.0
    %263 = vmatprep.mubr.f32.mxu0 0.0
    %264 = vmatmul.mubr.f32.gmra.mrb[0].mxu0 %v188
    %v265 = vpop.f32.mrb[0].mxu0
    %v266 = vadd.f32 0.0, %v265
    %v267 = vpop.f32.mrb[0].mxu0
    %268 = vmatprep.mubr.f32.mxu0 0.0
    %269 = vmatmul.mubr.f32.gmra.mrb[0].mxu0 %v191
    %v270 = vpop.f32.mrb[0].mxu0
    %v271 = vadd.f32 0.0, %v270
    %v272 = vpop.f32.mrb[0].mxu0
    %273 = vmatprep.mubr.f32.mxu0 0.0
    %274 = vmatmul.mubr.f32.gmra.mrb[0].mxu0 %v194
    %v275 = vpop.f32.mrb[0].mxu0
    %v276 = vadd.f32 0.0, %v275
    %v277 = vpop.f32.mrb[0].mxu0
    %278 = vmatprep.mubr.f32.mxu0 0.0
    %279 = vmatmul.mubr.f32.gmra.mrb[0].mxu0 %v197
    %v280 = vpop.f32.mrb[0].mxu0
    %v281 = vadd.f32 0.0, %v280
    %v282 = vpop.f32.mrb[0].mxu0
    %283 = vdwg.mxu0
    %v284 = vsel %vm186, %v266, -inf
    %285 = vmax.xlane.f32.xlu0 %v284
    %v286 = vpop.xlane.xlu0 %285
    %v287 = vsel %vm186, %v271, -inf
    %288 = vmax.xlane.f32.xlu0 %v287
    %v289 = vpop.xlane.xlu0 %288
    %v290 = vsel %vm186, %v276, -inf
    %291 = vmax.xlane.f32.xlu0 %v290
    %v292 = vpop.xlane.xlu0 %291
    %v293 = vsel %vm186, %v281, -inf
    %294 = vmax.xlane.f32.xlu0 %v293
    %v295 = vpop.xlane.xlu0 %294
    %v296 = vsub.f32 %v266, %v286
    %v297 = vsub.f32 %v271, %v289
    %v298 = vsub.f32 %v276, %v292
    %v299 = vsub.f32 %v281, %v295
    %v300 = vmul.f32 %v296, 1.442695
    %v301 = vpow.pop %v300
    %v302 = vmul.f32 %v297, 1.442695
    %v303 = vpow.pop %v302
    %v304 = vmul.f32 %v298, 1.442695
    %v305 = vpow.pop %v304
    %v306 = vmul.f32 %v299, 1.442695
    %v307 = vpow.pop %v306
    %v308 = vsel %vm186, %v301, 0.0
    %309 = vadd.xlane.f32.xlu0 %v308
    %v310 = vpop.xlane.xlu0 %309
    %v311 = vsel %vm186, %v303, 0.0
    %312 = vadd.xlane.f32.xlu0 %v311
    %v313 = vpop.xlane.xlu0 %312
    %v314 = vsel %vm186, %v305, 0.0
    %315 = vadd.xlane.f32.xlu0 %v314
    %v316 = vpop.xlane.xlu0 %315
    %v317 = vsel %vm186, %v307, 0.0
    %318 = vadd.xlane.f32.xlu0 %v317
    %v319 = vpop.xlane.xlu0 %318
    %v320 = vlog2.pop %v310
    %v321 = vmul.f32 %v320, 0.6931472
    %v322 = vlog2.pop %v313
    %v323 = vmul.f32 %v322, 0.6931472
    %v324 = vlog2.pop %v316
    %v325 = vmul.f32 %v324, 0.6931472
    %v326 = vlog2.pop %v319
    %v327 = vmul.f32 %v326, 0.6931472
    %v328 = vadd.f32 %v286, %v321
    %v329 = vadd.f32 %v289, %v323
    %v330 = vadd.f32 %v292, %v325
    %v331 = vadd.f32 %v295, %v327
    %v332 = vsub.f32 %v266, %v328
    %v333 = vsub.f32 %v271, %v329
    %v334 = vsub.f32 %v276, %v330
    %v335 = vsub.f32 %v281, %v331
    %v336 = vmul.f32 %v332, %v174
    %v337 = vmul.f32 %v333, %v175
    %v338 = vmul.f32 %v334, %v176
    %v339 = vmul.f32 %v335, %v177
    %v340 = vsel %vm186, %v336, 0.0
    %v341 = vsel %vm186, %v337, 0.0
    %v342 = vadd.f32 %v340, %v341
    %v343 = vsel %vm186, %v338, 0.0
    %v344 = vadd.f32 %v342, %v343
    %v345 = vsel %vm186, %v339, 0.0
    %v346 = vadd.f32 %v344, %v345
    %v347 = vrot.slane %v346, 4
    %v348 = vadd.f32 %v346, %v347
    %v349 = vrot.slane %v348, 2
    %v350 = vadd.f32 %v348, %v349
    %v351 = vrot.slane %v350, 1
    %v352 = vadd.f32 %v350, %v351
    %v353 = vmax.f32 %v352, -46.0517
    %v354 = vmul.f32 %v157, %v353
    %v355 = vmul.f32 %v158, %v353
    %v356 = vmul.f32 %v159, %v353
    %v357 = vmul.f32 %v160, %v353
    %v358 = vsel %vm186, %v354, 0.0
    %359 = vadd.xlane.f32.xlu0 %v358
    %v360 = vpop.xlane.xlu0 %359
    %v361 = vsel %vm186, %v355, 0.0
    %362 = vadd.xlane.f32.xlu0 %v361
    %v363 = vpop.xlane.xlu0 %362
    %v364 = vsel %vm186, %v356, 0.0
    %365 = vadd.xlane.f32.xlu0 %v364
    %v366 = vpop.xlane.xlu0 %365
    %v367 = vsel %vm186, %v357, 0.0
    %368 = vadd.xlane.f32.xlu0 %v367
    %v369 = vpop.xlane.xlu0 %368
    %v372 = vlaneseq
    %v373 = vshrl.u32 %v372, 7
    %v374 = vsub.s32 0, %v373
    %v375 = vrot.slane %v112, %v374
    %377 = vbcast.lane.b32.xlu0 %v375, 256
    %v378 = vpop.permute.xlu0 %377
    %v379 = vlaneseq
    %v380 = vshrl.u32 %v379, 7
    %v381 = vsub.s32 1, %v380
    %v382 = vrot.slane %v112, %v381
    %384 = vbcast.lane.b32.xlu0 %v382, 256
    %v385 = vpop.permute.xlu0 %384
    %v386 = vlaneseq
    %v387 = vshrl.u32 %v386, 7
    %v388 = vsub.s32 0, %v387
    %v389 = vrot.slane %v113, %v388
    %391 = vbcast.lane.b32.xlu0 %v389, 256
    %v392 = vpop.permute.xlu0 %391
    %v393 = vlaneseq
    %v394 = vshrl.u32 %v393, 7
    %v395 = vsub.s32 1, %v394
    %v396 = vrot.slane %v113, %v395
    %398 = vbcast.lane.b32.xlu0 %v396, 256
    %v399 = vpop.permute.xlu0 %398
    %v404 = vmul.f32 %v360, %v378
    %v405 = vmul.f32 %v363, %v385
    %v406 = vmul.f32 %v366, %v392
    %v407 = vmul.f32 %v369, %v399
    %412 = vset.pattern.permute.xlu0 0
    %413 = vperm.xlu0 %412, %v404
    %v414 = vpop.permute.xlu0 %413
    %415 = vset.pattern.permute.xlu0 0
    %416 = vperm.xlu0 %415, %v405
    %v417 = vpop.permute.xlu0 %416
    %418 = vset.pattern.permute.xlu0 0
    %419 = vperm.xlu0 %418, %v406
    %v420 = vpop.permute.xlu0 %419
    %421 = vset.pattern.permute.xlu0 0
    %422 = vperm.xlu0 %421, %v407
    %v423 = vpop.permute.xlu0 %422
    %v424 = vlaneseq
    %v425 = vshrl.u32 %v424, 7
    %v426 = vsub.s32 %v100, %v425
    %v427 = vrot.slane %v414, %v426
    %v428 = vlaneseq
    %v429 = vshrl.u32 %v428, 7
    %v430 = vsub.s32 %v100, %v429
    %v431 = vrot.slane %v417, %v430
    %v432 = vlaneseq
    %v433 = vshrl.u32 %v432, 7
    %v434 = vsub.s32 %v100, %v433
    %v435 = vrot.slane %v420, %v434
    %v436 = vlaneseq
    %v437 = vshrl.u32 %v436, 7
    %v438 = vsub.s32 %v100, %v437
    %v439 = vrot.slane %v423, %v438
    %vm440 = vcmask 1041409
    %v441 = vsel %vm440, %v431, %v427
    %v442 = vsel %vm440, %v439, %v435
    %v445 = vsel %vm114, %v441, 0.0
    %446 = vadd.xlane.f32.xlu0 %v445
    %v447 = vpop.xlane.xlu0 %446
    %v448 = vsel %vm114, %v442, 0.0
    %449 = vadd.xlane.f32.xlu0 %v448
    %v450 = vpop.xlane.xlu0 %449
    %v451 = vmax.f32 %v117, 1e-05
    %v452 = vmax.f32 %v120, 1e-05
    %v453 = vrcp.pop %v451
    %v454 = vmul.f32 %v447, %v453
    %v455 = vrcp.pop %v452
    %v456 = vmul.f32 %v450, %v455
    %vm457 = vcmp.eq.f32.partialorder %v117, 0.0
    %vm458 = vcmp.eq.f32.partialorder %v120, 0.0
    %v459 = vsel %vm457, 0.0, %v454
    %v460 = vsel %vm458, 0.0, %v456
    %v461 = vld [vmem:[#allocation8] sm:$0xff]
    %v462 = vld [vmem:[#allocation8 + $0x8] sm:$0xff]
    %v463 = vld [vmem:[#allocation8 + $0x10] sm:$0xff]
    %v464 = vld [vmem:[#allocation8 + $0x18] sm:$0xff]
    %v465 = vld [vmem:[#allocation10] sm:$0xff]
    %v466 = vld [vmem:[#allocation10 + $0x8] sm:$0xff]
    %v467 = vld [vmem:[#allocation10 + $0x10] sm:$0xff]
    %v468 = vld [vmem:[#allocation10 + $0x18] sm:$0xff]
    %v470 = vsel %vm186, %v461, 0
    %v473 = vsel %vm186, %v462, 0
    %v476 = vsel %vm186, %v463, 0
    %v479 = vsel %vm186, %v464, 0
    %481 = vmatprep.subr.mxu0 0.0
    %482 = vmatpush1.msra.mxu0 %v465
    %483 = vmatprep.subr.mxu0 0.0
    %484 = vmatpush1.msra.mxu0 %v466
    %485 = vmatprep.subr.mxu0 0.0
    %486 = vmatpush1.msra.mxu0 %v467
    %487 = vmatprep.subr.mxu0 0.0
    %488 = vmatpush1.msra.mxu0 %v468
    %489 = vmatprep.subr.mxu0 0.0
    %490 = vmatpush1.msra.mxu0 0.0
    %491 = vmatprep.subr.mxu0 0.0
    %492 = vmatpush1.msra.mxu0 0.0
    %493 = vmatprep.subr.mxu0 0.0
    %494 = vmatpush1.msra.mxu0 0.0
    %495 = vmatprep.subr.mxu0 0.0
    %496 = vmatpush1.msra.mxu0 0.0
    %497 = vmatprep.subr.mxu0 0.0
    %498 = vmatpush1.msra.mxu0 0.0
    %499 = vmatprep.subr.mxu0 0.0
    %500 = vmatpush1.msra.mxu0 0.0
    %501 = vmatprep.subr.mxu0 0.0
    %502 = vmatpush1.msra.mxu0 0.0
    %503 = vmatprep.subr.mxu0 0.0
    %504 = vmatpush1.msra.mxu0 0.0
    %505 = vmatprep.subr.mxu0 0.0
    %506 = vmatpush1.msra.mxu0 0.0
    %507 = vmatprep.subr.mxu0 0.0
    %508 = vmatpush1.msra.mxu0 0.0
    %509 = vmatprep.subr.mxu0 0.0
    %510 = vmatpush1.msra.mxu0 0.0
    %511 = vmatprep.subr.mxu0 0.0
    %512 = vmatpush1.msra.mxu0 0.0
    %513 = vmatprep.subr.mxu0 0.0
    %514 = vmatpush1.msra.mxu0 0.0
    %515 = vmatprep.subr.mxu0 0.0
    %516 = vmatpush1.msra.mxu0 0.0
    %517 = vmatprep.subr.mxu0 0.0
    %518 = vmatpush1.msra.mxu0 0.0
    %519 = vmatprep.subr.mxu0 0.0
    %520 = vmatpush1.msra.mxu0 0.0
    %521 = vmatprep.subr.mxu0 0.0
    %522 = vmatpush1.msra.mxu0 0.0
    %523 = vmatprep.subr.mxu0 0.0
    %524 = vmatpush1.msra.mxu0 0.0
    %525 = vmatprep.subr.mxu0 0.0
    %526 = vmatpush1.msra.mxu0 0.0
    %527 = vmatprep.subr.mxu0 0.0
    %528 = vmatpush1.msra.mxu0 0.0
    %529 = vmatprep.subr.mxu0 0.0
    %530 = vmatpush1.msra.mxu0 0.0
    %531 = vmatprep.subr.mxu0 0.0
    %532 = vmatpush1.msra.mxu0 0.0
    %533 = vmatprep.subr.mxu0 0.0
    %534 = vmatpush1.msra.mxu0 0.0
    %535 = vmatprep.subr.mxu0 0.0
    %536 = vmatpush1.msra.mxu0 0.0
    %537 = vmatprep.subr.mxu0 0.0
    %538 = vmatpush1.msra.mxu0 0.0
    %539 = vmatprep.subr.mxu0 0.0
    %540 = vmatpush1.msra.mxu0 0.0
    %541 = vmatprep.subr.mxu0 0.0
    %542 = vmatpush1.msra.mxu0 0.0
    %543 = vmatprep.subr.mxu0 0.0
    %544 = vmatpush1.msra.mxu0 0.0
    %545 = vmatprep.mubr.f32.mxu0 0.0
    %546 = vmatmul.mubr.f32.gmra.mrb[0].mxu0 %v470
    %v547 = vpop.f32.mrb[0].mxu0
    %v548 = vadd.f32 0.0, %v547
    %v549 = vpop.f32.mrb[0].mxu0
    %550 = vmatprep.mubr.f32.mxu0 0.0
    %551 = vmatmul.mubr.f32.gmra.mrb[0].mxu0 %v473
    %v552 = vpop.f32.mrb[0].mxu0
    %v553 = vadd.f32 0.0, %v552
    %v554 = vpop.f32.mrb[0].mxu0
    %555 = vmatprep.mubr.f32.mxu0 0.0
    %556 = vmatmul.mubr.f32.gmra.mrb[0].mxu0 %v476
    %v557 = vpop.f32.mrb[0].mxu0
    %v558 = vadd.f32 0.0, %v557
    %v559 = vpop.f32.mrb[0].mxu0
    %560 = vmatprep.mubr.f32.mxu0 0.0
    %561 = vmatmul.mubr.f32.gmra.mrb[0].mxu0 %v479
    %v562 = vpop.f32.mrb[0].mxu0
    %v563 = vadd.f32 0.0, %v562
    %v564 = vpop.f32.mrb[0].mxu0
    %565 = vdwg.mxu0
    %v566 = vsel %vm186, %v548, -inf
    %567 = vmax.xlane.f32.xlu0 %v566
    %v568 = vpop.xlane.xlu0 %567
    %v569 = vsel %vm186, %v553, -inf
    %570 = vmax.xlane.f32.xlu0 %v569
    %v571 = vpop.xlane.xlu0 %570
    %v572 = vsel %vm186, %v558, -inf
    %573 = vmax.xlane.f32.xlu0 %v572
    %v574 = vpop.xlane.xlu0 %573
    %v575 = vsel %vm186, %v563, -inf
    %576 = vmax.xlane.f32.xlu0 %v575
    %v577 = vpop.xlane.xlu0 %576
    %v578 = vsub.f32 %v548, %v568
    %v579 = vsub.f32 %v553, %v571
    %v580 = vsub.f32 %v558, %v574
    %v581 = vsub.f32 %v563, %v577
    %v582 = vmul.f32 %v578, 1.442695
    %v583 = vpow.pop %v582
    %v584 = vmul.f32 %v579, 1.442695
    %v585 = vpow.pop %v584
    %v586 = vmul.f32 %v580, 1.442695
    %v587 = vpow.pop %v586
    %v588 = vmul.f32 %v581, 1.442695
    %v589 = vpow.pop %v588
    %v590 = vsel %vm186, %v583, 0.0
    %591 = vadd.xlane.f32.xlu0 %v590
    %v592 = vpop.xlane.xlu0 %591
    %v593 = vsel %vm186, %v585, 0.0
    %594 = vadd.xlane.f32.xlu0 %v593
    %v595 = vpop.xlane.xlu0 %594
    %v596 = vsel %vm186, %v587, 0.0
    %597 = vadd.xlane.f32.xlu0 %v596
    %v598 = vpop.xlane.xlu0 %597
    %v599 = vsel %vm186, %v589, 0.0
    %600 = vadd.xlane.f32.xlu0 %v599
    %v601 = vpop.xlane.xlu0 %600
    %v602 = vlog2.pop %v592
    %v603 = vmul.f32 %v602, 0.6931472
    %v604 = vlog2.pop %v595
    %v605 = vmul.f32 %v604, 0.6931472
    %v606 = vlog2.pop %v598
    %v607 = vmul.f32 %v606, 0.6931472
    %v608 = vlog2.pop %v601
    %v609 = vmul.f32 %v608, 0.6931472
    %v610 = vadd.f32 %v568, %v603
    %v611 = vadd.f32 %v571, %v605
    %v612 = vadd.f32 %v574, %v607
    %v613 = vadd.f32 %v577, %v609
    %v614 = vsub.f32 %v548, %v610
    %v615 = vsub.f32 %v553, %v611
    %v616 = vsub.f32 %v558, %v612
    %v617 = vsub.f32 %v563, %v613
    %v618 = vmul.f32 %v614, %v174
    %v619 = vmul.f32 %v615, %v175
    %v620 = vmul.f32 %v616, %v176
    %v621 = vmul.f32 %v617, %v177
    %v622 = vsel %vm186, %v618, 0.0
    %v623 = vsel %vm186, %v619, 0.0
    %v624 = vadd.f32 %v622, %v623
    %v625 = vsel %vm186, %v620, 0.0
    %v626 = vadd.f32 %v624, %v625
    %v627 = vsel %vm186, %v621, 0.0
    %v628 = vadd.f32 %v626, %v627
    %v629 = vrot.slane %v628, 4
    %v630 = vadd.f32 %v628, %v629
    %v631 = vrot.slane %v630, 2
    %v632 = vadd.f32 %v630, %v631
    %v633 = vrot.slane %v632, 1
    %v634 = vadd.f32 %v632, %v633
    %v635 = vmax.f32 %v634, -46.0517
    %v636 = vmul.f32 %v157, %v635
    %v637 = vmul.f32 %v158, %v635
    %v638 = vmul.f32 %v159, %v635
    %v639 = vmul.f32 %v160, %v635
    %v640 = vsel %vm186, %v636, 0.0
    %641 = vadd.xlane.f32.xlu0 %v640
    %v642 = vpop.xlane.xlu0 %641
    %v643 = vsel %vm186, %v637, 0.0
    %644 = vadd.xlane.f32.xlu0 %v643
    %v645 = vpop.xlane.xlu0 %644
    %v646 = vsel %vm186, %v638, 0.0
    %647 = vadd.xlane.f32.xlu0 %v646
    %v648 = vpop.xlane.xlu0 %647
    %v649 = vsel %vm186, %v639, 0.0
    %650 = vadd.xlane.f32.xlu0 %v649
    %v651 = vpop.xlane.xlu0 %650
    %v652 = vmul.f32 %v642, %v378
    %v653 = vmul.f32 %v645, %v385
    %v654 = vmul.f32 %v648, %v392
    %v655 = vmul.f32 %v651, %v399
    %660 = vset.pattern.permute.xlu0 0
    %661 = vperm.xlu0 %660, %v652
    %v662 = vpop.permute.xlu0 %661
    %663 = vset.pattern.permute.xlu0 0
    %664 = vperm.xlu0 %663, %v653
    %v665 = vpop.permute.xlu0 %664
    %666 = vset.pattern.permute.xlu0 0
    %667 = vperm.xlu0 %666, %v654
    %v668 = vpop.permute.xlu0 %667
    %669 = vset.pattern.permute.xlu0 0
    %670 = vperm.xlu0 %669, %v655
    %v671 = vpop.permute.xlu0 %670
    %v672 = vlaneseq
    %v673 = vshrl.u32 %v672, 7
    %v674 = vsub.s32 %v100, %v673
    %v675 = vrot.slane %v662, %v674
    %v676 = vlaneseq
    %v677 = vshrl.u32 %v676, 7
    %v678 = vsub.s32 %v100, %v677
    %v679 = vrot.slane %v665, %v678
    %v680 = vlaneseq
    %v681 = vshrl.u32 %v680, 7
    %v682 = vsub.s32 %v100, %v681
    %v683 = vrot.slane %v668, %v682
    %v684 = vlaneseq
    %v685 = vshrl.u32 %v684, 7
    %v686 = vsub.s32 %v100, %v685
    %v687 = vrot.slane %v671, %v686
    %v688 = vsel %vm440, %v679, %v675
    %v689 = vsel %vm440, %v687, %v683
    %v692 = vsel %vm114, %v688, 0.0
    %693 = vadd.xlane.f32.xlu0 %v692
    %v694 = vpop.xlane.xlu0 %693
    %v695 = vsel %vm114, %v689, 0.0
    %696 = vadd.xlane.f32.xlu0 %v695
    %v697 = vpop.xlane.xlu0 %696
    %v698 = vmul.f32 %v694, %v453
    %v699 = vmul.f32 %v697, %v455
    %v700 = vsel %vm457, 0.0, %v698
    %v701 = vsel %vm458, 0.0, %v699
    %v702 = vsub.f32 %v460, %v701
    %v703 = vsub.f32 %v459, %v700
    %v704 = vsub.f32 %v702, %v703
    %v705 = vmul.f32 %v704, 0.1
    %v706 = vmin.f32 %v705, 0.0
    %v707 = vand.u32 2147483647, %v705
    %v708 = vsub.f32 0.0, %v707
    %v709 = vmul.f32 %v708, 1.442695
    %v710 = vpow.pop %v709
    %v711 = vadd.f32 %v710, 1.0
    %v712 = vlog2.pop %v711
    %v713 = vmul.f32 %v712, 0.6931472
    %v714 = vsub.f32 %v706, %v713
    %v715 = vsub.f32 0.0, %v714
    %vm716 = vcmask 1024
    %v717 = vsel %vm716, %v715, 0.0
    %718 = vadd.xlane.f32.xlu0 %v717
    %v719 = vpop.xlane.xlu0 %718
    %v720 = vrot.slane %v719, 4
    %v721 = vadd.f32 %v719, %v720
    %v722 = vrot.slane %v721, 2
    %v723 = vadd.f32 %v721, %v722
    %v724 = vrot.slane %v723, 1
    %v725 = vadd.f32 %v723, %v724
    %s726 = vtos %v725
    %v727 = vstv %s726
    %v728 = vrcp.pop 2.0
    %v729 = vmul.f32 %v727, %v728
    %vm730 = vcmask 0
    %731 = vst.msk [vmem:[#allocation11] sm:$0x1] %vm730, %v729
    // Predicated region
    $region46: #{tpu_custom_call.1} parent=1 // pred_check
      _
    $region47: #{tpu_custom_call.1} parent=1 // pred_check_branch
      %733 = sbr.rel (0) target = $region49
    $region48: #{tpu_custom_call.1} parent=1 // pred_region
      %s735 = ssub.s32 16, 16
      %736 = vsyncadd [#allocation4], %s735
      %s738 = sshll.u32 [#allocation11], 4
      %s739 = int_to_ptr.vmem [resolvable:$true] %s738
      %741 = dma.vmem_to_hbm [thread:$0]  %s739, 16, %s6, [#allocation4]
    $region49: #{tpu_custom_call.1} parent=1 // pred_fallthru
      _
    // Predicated region
    $region50: #{tpu_custom_call.1} parent=1 // pred_check
      _
    $region51: #{tpu_custom_call.1} parent=1 // pred_check_branch
      %743 = sbr.rel (0) target = $region53
    $region52: #{tpu_custom_call.1} parent=1 // pred_region
      %744 = dma.done [#allocation4], 16
    $region53: #{tpu_custom_call.1} parent=1 // pred_fallthru
      _
    %745 = vsyncpa [#allocation3], 1
    %746 = vsyncpa [#allocation6], 1
    %747 = vsyncpa [#allocation9], 1
    %748 = vsyncpa [#allocation4], 1

</llo_original>
